<compile_context>
chip_gen: v7x
topology: tpu7x:2x2x1
jax: 0.10.0
libtpu: 0.0.40
codegen_flags: <defaults>
</compile_context>

<pallas_src>
import functools

import jax
import jax.numpy as jnp
from jax.experimental import pallas as pl
from jax.experimental.pallas import tpu as pltpu

MIN_SIGMA = 1e-6


def _low_rank_kernel(coef_ref, u_ref, s_ref, vh_ref, out_ref, *, bb):
    # coef_ref: (nb,)            SMEM, raw thres_coef (full array)
    # u_ref:    (bb, nt, k)      VMEM, left singular vectors (resident over n)
    # s_ref:    (bb, 1, k)       VMEM, singular values, descending (resident over n)
    # vh_ref:   (bb, k, tile_n)  VMEM, right singular vectors (lane tile)
    # out_ref:  (bb, nt, tile_n) VMEM, reconstruction tile
    b0 = pl.program_id(0) * bb
    for i in range(bb):                      # static unroll: back-to-back matmuls
        s_i = s_ref[i]                                       # (1, k)

        # thres = sigmoid(thres_coef[b]) * S[b, 0]   (un-clamped leading sigma)
        c_i = jnp.full((1, 1), coef_ref[b0 + i], dtype=jnp.float32)
        thres = jax.nn.sigmoid(c_i) * s_i[:, 0:1]            # (1, 1)

        # S = clamp(S, min=min_sigma)
        s_c = jnp.maximum(s_i, MIN_SIGMA)                    # (1, k)

        # S_thresh = relu(S - thres) + thres * sigmoid(S - thres)
        diff = s_c - thres
        s_thresh = jnp.maximum(diff, 0.0) + thres * jax.nn.sigmoid(diff)

        # US = U * S_thresh ;  out = US @ Vh   (MXU, f32 accumulation)
        # NOTE: matmul inputs stay f32 (a bf16 cast would risk the 1e-3
        # tolerance vs. the f32 reference for this rank-k reconstruction).
        us = u_ref[i] * s_thresh                             # (nt, k)
        out_ref[i] = jnp.dot(
            us, vh_ref[i], preferred_element_type=jnp.float32
        ).astype(out_ref.dtype)


def _choose_tiles(nb, nt, k, n, budget_bytes=40 * 1024 * 1024):
    """Pick (batch block, lane tile) under a VMEM budget safe for v5e/v6e/v7x."""
    tile_n = n if n <= 2048 else 2048                  # multiple of 128 or == n
    bb = max(d for d in range(1, min(nb, 8) + 1) if nb % d == 0)

    def step_bytes(bb_, tn_):
        # double-buffered (x2) f32 blocks: U, S, Vh, out
        return 2 * 4 * bb_ * (nt * k + k + k * tn_ + nt * tn_)

    while step_bytes(bb, tile_n) > budget_bytes:
        if tile_n > 128 and tile_n % 256 == 0:
            tile_n //= 2                               # stays a multiple of 128
        elif bb > 1:
            bb = max(d for d in range(1, bb) if nb % d == 0)
        else:
            break
    return bb, tile_n, step_bytes(bb, tile_n)


def lnet_xyt_batch(x, thres_coef):
    """Forward pass of LNetXYTBatch."""
    squeeze_last = False
    if x.ndim == 5:
        x = jnp.squeeze(x, -1)
        squeeze_last = True
    nb, nt, nx, ny = x.shape
    n = nx * ny
    L = x.reshape(nb, nt, n).astype(jnp.float32)

    # Mirror the torch parameter-resizing glue (slice or pad with -2.0).
    if thres_coef.shape[0] != nb:
        if thres_coef.shape[0] > nb:
            coef = thres_coef[:nb]
        else:
            coef = jnp.concatenate(
                [thres_coef,
                 jnp.full((nb - thres_coef.shape[0],), -2.0, jnp.float32)]
            )
    else:
        coef = thres_coef
    coef = coef.astype(jnp.float32)

    # TODO(synk): SVD has no Pallas/Mosaic equivalent; computed with plain JAX/XLA.
    U, S, Vh = jnp.linalg.svd(L, full_matrices=False)   # U:(nb,nt,k) S:(nb,k) Vh:(nb,k,n)
    k = S.shape[-1]

    bb, tile_n, step_bytes = _choose_tiles(nb, nt, k, n)
    grid = (nb // bb, pl.cdiv(n, tile_n))
    vmem_limit = int(min(64 * 1024 * 1024,
                         max(32 * 1024 * 1024, step_bytes + (4 << 20))))

    # TODO(synk): if k ever exceeds ~256 (very large nt), add a k grid axis with
    # a VMEM accumulator instead of loading the full (k, tile_n) Vh block.
    kernel = functools.partial(_low_rank_kernel, bb=bb)
    out = pl.pallas_call(
        kernel,
        out_shape=jax.ShapeDtypeStruct((nb, nt, n), x.dtype),
        grid_spec=pl.GridSpec(
            grid=grid,
            in_specs=[
                # thres_coef: whole array in SMEM, read as scalars per batch elem
                pl.BlockSpec(memory_space=pltpu.MemorySpace.SMEM),
                # U / S resident across the n axis (index_map ignores j)
                pl.BlockSpec((bb, nt, k), lambda b, j: (b, 0, 0)),
                pl.BlockSpec((bb, 1, k), lambda b, j: (b, 0, 0)),
                # Vh streamed in lane tiles (double-buffered by BlockSpec)
                pl.BlockSpec((bb, k, tile_n), lambda b, j: (b, 0, j)),
            ],
            out_specs=pl.BlockSpec((bb, nt, tile_n), lambda b, j: (b, 0, j)),
        ),
        compiler_params=pltpu.CompilerParams(
            dimension_semantics=("parallel", "parallel"),
            vmem_limit_bytes=vmem_limit,
        ),
    )(coef, U, S.reshape(nb, 1, k), Vh)

    L_out = out.reshape(nb, nt, nx, ny)
    if squeeze_last:
        L_out = L_out[..., None]
    return L_out


def _reference_post_svd(x, thres_coef):
    """Pure-JAX reference of the post-SVD math (for a sanity check)."""
    nb, nt, nx, ny = x.shape
    L = x.reshape(nb, nt, nx * ny).astype(jnp.float32)
    U, S, Vh = jnp.linalg.svd(L, full_matrices=False)
    thres = (jax.nn.sigmoid(thres_coef) * S[:, 0])[:, None]
    S_c = jnp.maximum(S, MIN_SIGMA)
    S_thresh = jnp.maximum(S_c - thres, 0.0) + thres * jax.nn.sigmoid(S_c - thres)
    US = U * S_thresh[:, None, :]
    return jnp.matmul(US, Vh).reshape(nb, nt, nx, ny)


if __name__ == "__main__":
    nb, nt, nx, ny = 2, 8, 16, 16       # num_patches == nb
    key = jax.random.PRNGKey(0)
    x = jax.random.normal(key, (nb, nt, nx, ny), dtype=jnp.float32)

    # Deterministic parameter init, matching nn.Parameter(torch.full((nb,), -2.0))
    thres_coef = jnp.full((nb,), -2.0, dtype=jnp.float32)

    out = jax.block_until_ready(lnet_xyt_batch(x, thres_coef))
    assert out.shape == (nb, nt, nx, ny)

    ref = jax.block_until_ready(_reference_post_svd(x, thres_coef))
    assert jnp.allclose(out, ref, rtol=1e-3, atol=1e-3), "mismatch vs reference"

    print("KERNEL_OK")
</pallas_src>

<mosaic_0001>
module attributes {stable_mosaic.version = 11 : i64} {
  func.func @_low_rank_kernel(%arg0: i32, %arg1: i32, %arg2: memref<2xf32, #tpu.memory_space<smem>>, %arg3: memref<2x8x8xf32, #tpu.memory_space<vmem>>, %arg4: memref<2x1x8xf32, #tpu.memory_space<vmem>>, %arg5: memref<2x8x256xf32, #tpu.memory_space<vmem>>, %arg6: memref<2x8x256xf32, #tpu.memory_space<vmem>>) attributes {dimension_semantics = [#tpu.dimension_semantics<parallel>, #tpu.dimension_semantics<parallel>], iteration_bounds = array<i64: 1, 1>, scalar_prefetch = 0 : i64, scratch_operands = 0 : i64, tpu.core_type = #tpu.core_type<tc>, window_params = [{transform_indices = @transform_0, window_bounds = array<i64: 2>}, {transform_indices = @transform_1, window_bounds = array<i64: 2, 8, 8>}, {transform_indices = @transform_2, window_bounds = array<i64: 2, 1, 8>}, {transform_indices = @transform_3, window_bounds = array<i64: 2, 8, 256>}, {transform_indices = @transform_4, window_bounds = array<i64: 2, 8, 256>}]} {
    %c2_i32 = arith.constant 2 : i32
    %0 = arith.muli %arg0, %c2_i32 : i32
    %c0 = arith.constant 0 : index
    %c0_0 = arith.constant 0 : index
    %c0_1 = arith.constant 0 : index
    %1 = vector.load %arg4[%c0, %c0_0, %c0_1] : memref<2x1x8xf32, #tpu.memory_space<vmem>>, vector<1x1x8xf32>
    %2 = vector.shape_cast %1 : vector<1x1x8xf32> to vector<1x8xf32>
    %c0_i32 = arith.constant 0 : i32
    %3 = arith.addi %0, %c0_i32 : i32
    %4 = arith.index_cast %3 : i32 to index
    %5 = memref.load %arg2[%4] : memref<2xf32, #tpu.memory_space<smem>>
    %6 = vector.broadcast %5 : f32 to vector<1x1xf32>
    %7 = arith.negf %6 : vector<1x1xf32>
    %8 = math.exp %7 : vector<1x1xf32>
    %cst = arith.constant 1.000000e+00 : f32
    %9 = vector.broadcast %cst : f32 to vector<1x1xf32>
    %10 = arith.addf %9, %8 : vector<1x1xf32>
    %11 = arith.divf %9, %10 : vector<1x1xf32>
    %12 = vector.extract_strided_slice %2 {offsets = [0, 0], sizes = [1, 1], strides = [1, 1]} : vector<1x8xf32> to vector<1x1xf32>
    %13 = arith.mulf %11, %12 : vector<1x1xf32>
    %cst_2 = arith.constant 9.99999997E-7 : f32
    %14 = vector.broadcast %cst_2 : f32 to vector<1x8xf32>
    %15 = arith.maximumf %2, %14 : vector<1x8xf32>
    %16 = vector.broadcast %13 : vector<1x1xf32> to vector<1x8xf32>
    %17 = arith.subf %15, %16 : vector<1x8xf32>
    %cst_3 = arith.constant 0.000000e+00 : f32
    %18 = vector.broadcast %cst_3 : f32 to vector<1x8xf32>
    %19 = arith.maximumf %17, %18 : vector<1x8xf32>
    %20 = arith.negf %17 : vector<1x8xf32>
    %21 = math.exp %20 : vector<1x8xf32>
    %cst_4 = arith.constant 1.000000e+00 : f32
    %22 = vector.broadcast %cst_4 : f32 to vector<1x8xf32>
    %23 = arith.addf %22, %21 : vector<1x8xf32>
    %24 = arith.divf %22, %23 : vector<1x8xf32>
    %25 = vector.broadcast %13 : vector<1x1xf32> to vector<1x8xf32>
    %26 = arith.mulf %25, %24 : vector<1x8xf32>
    %27 = arith.addf %19, %26 : vector<1x8xf32>
    %c0_5 = arith.constant 0 : index
    %c0_6 = arith.constant 0 : index
    %c0_7 = arith.constant 0 : index
    %28 = vector.load %arg3[%c0_5, %c0_6, %c0_7] : memref<2x8x8xf32, #tpu.memory_space<vmem>>, vector<1x8x8xf32>
    %29 = vector.shape_cast %28 : vector<1x8x8xf32> to vector<8x8xf32>
    %30 = vector.broadcast %27 : vector<1x8xf32> to vector<8x8xf32>
    %31 = arith.mulf %29, %30 : vector<8x8xf32>
    %c0_8 = arith.constant 0 : index
    %c0_9 = arith.constant 0 : index
    %c0_10 = arith.constant 0 : index
    %32 = vector.load %arg5[%c0_8, %c0_9, %c0_10] : memref<2x8x256xf32, #tpu.memory_space<vmem>>, vector<1x8x256xf32>
    %33 = vector.shape_cast %32 : vector<1x8x256xf32> to vector<8x256xf32>
    %cst_11 = arith.constant dense<0.000000e+00> : vector<8x256xf32>
    %34 = tpu.matmul %31, %33, %cst_11 {dimension_numbers = #tpu.dot_dimension_numbers<[1], [0], [0], [1], [0, 0, 1, 1], [], []>} : vector<8x8xf32>, vector<8x256xf32>, vector<8x256xf32> -> vector<8x256xf32>
    %c0_12 = arith.constant 0 : index
    %c0_13 = arith.constant 0 : index
    %c0_14 = arith.constant 0 : index
    %35 = vector.load %arg6[%c0_12, %c0_13, %c0_14] : memref<2x8x256xf32, #tpu.memory_space<vmem>>, vector<1x8x256xf32>
    %36 = vector.shape_cast %35 : vector<1x8x256xf32> to vector<8x256xf32>
    %37 = vector.shape_cast %34 : vector<8x256xf32> to vector<1x8x256xf32>
    tpu.vector_store %arg6[%c0_12, %c0_13, %c0_14], %37 {strides = array<i32>} : memref<2x8x256xf32, #tpu.memory_space<vmem>>, vector<1x8x256xf32>,
    %c1 = arith.constant 1 : index
    %c0_15 = arith.constant 0 : index
    %c0_16 = arith.constant 0 : index
    %38 = vector.load %arg4[%c1, %c0_15, %c0_16] : memref<2x1x8xf32, #tpu.memory_space<vmem>>, vector<1x1x8xf32>
    %39 = vector.shape_cast %38 : vector<1x1x8xf32> to vector<1x8xf32>
    %c1_i32 = arith.constant 1 : i32
    %40 = arith.addi %0, %c1_i32 : i32
    %41 = arith.index_cast %40 : i32 to index
    %42 = memref.load %arg2[%41] : memref<2xf32, #tpu.memory_space<smem>>
    %43 = vector.broadcast %42 : f32 to vector<1x1xf32>
    %44 = arith.negf %43 : vector<1x1xf32>
    %45 = math.exp %44 : vector<1x1xf32>
    %cst_17 = arith.constant 1.000000e+00 : f32
    %46 = vector.broadcast %cst_17 : f32 to vector<1x1xf32>
    %47 = arith.addf %46, %45 : vector<1x1xf32>
    %48 = arith.divf %46, %47 : vector<1x1xf32>
    %49 = vector.extract_strided_slice %39 {offsets = [0, 0], sizes = [1, 1], strides = [1, 1]} : vector<1x8xf32> to vector<1x1xf32>
    %50 = arith.mulf %48, %49 : vector<1x1xf32>
    %cst_18 = arith.constant 9.99999997E-7 : f32
    %51 = vector.broadcast %cst_18 : f32 to vector<1x8xf32>
    %52 = arith.maximumf %39, %51 : vector<1x8xf32>
    %53 = vector.broadcast %50 : vector<1x1xf32> to vector<1x8xf32>
    %54 = arith.subf %52, %53 : vector<1x8xf32>
    %cst_19 = arith.constant 0.000000e+00 : f32
    %55 = vector.broadcast %cst_19 : f32 to vector<1x8xf32>
    %56 = arith.maximumf %54, %55 : vector<1x8xf32>
    %57 = arith.negf %54 : vector<1x8xf32>
    %58 = math.exp %57 : vector<1x8xf32>
    %cst_20 = arith.constant 1.000000e+00 : f32
    %59 = vector.broadcast %cst_20 : f32 to vector<1x8xf32>
    %60 = arith.addf %59, %58 : vector<1x8xf32>
    %61 = arith.divf %59, %60 : vector<1x8xf32>
    %62 = vector.broadcast %50 : vector<1x1xf32> to vector<1x8xf32>
    %63 = arith.mulf %62, %61 : vector<1x8xf32>
    %64 = arith.addf %56, %63 : vector<1x8xf32>
    %c1_21 = arith.constant 1 : index
    %c0_22 = arith.constant 0 : index
    %c0_23 = arith.constant 0 : index
    %65 = vector.load %arg3[%c1_21, %c0_22, %c0_23] : memref<2x8x8xf32, #tpu.memory_space<vmem>>, vector<1x8x8xf32>
    %66 = vector.shape_cast %65 : vector<1x8x8xf32> to vector<8x8xf32>
    %67 = vector.broadcast %64 : vector<1x8xf32> to vector<8x8xf32>
    %68 = arith.mulf %66, %67 : vector<8x8xf32>
    %c1_24 = arith.constant 1 : index
    %c0_25 = arith.constant 0 : index
    %c0_26 = arith.constant 0 : index
    %69 = vector.load %arg5[%c1_24, %c0_25, %c0_26] : memref<2x8x256xf32, #tpu.memory_space<vmem>>, vector<1x8x256xf32>
    %70 = vector.shape_cast %69 : vector<1x8x256xf32> to vector<8x256xf32>
    %cst_27 = arith.constant dense<0.000000e+00> : vector<8x256xf32>
    %71 = tpu.matmul %68, %70, %cst_27 {dimension_numbers = #tpu.dot_dimension_numbers<[1], [0], [0], [1], [0, 0, 1, 1], [], []>} : vector<8x8xf32>, vector<8x256xf32>, vector<8x256xf32> -> vector<8x256xf32>
    %c1_28 = arith.constant 1 : index
    %c0_29 = arith.constant 0 : index
    %c0_30 = arith.constant 0 : index
    %72 = vector.load %arg6[%c1_28, %c0_29, %c0_30] : memref<2x8x256xf32, #tpu.memory_space<vmem>>, vector<1x8x256xf32>
    %73 = vector.shape_cast %72 : vector<1x8x256xf32> to vector<8x256xf32>
    %74 = vector.shape_cast %71 : vector<8x256xf32> to vector<1x8x256xf32>
    tpu.vector_store %arg6[%c1_28, %c0_29, %c0_30], %74 {strides = array<i32>} : memref<2x8x256xf32, #tpu.memory_space<vmem>>, vector<1x8x256xf32>,
    return
  }
  func.func @transform_0(%arg0: i32, %arg1: i32) -> i32 {
    %c0_i32 = arith.constant 0 : i32
    %c0_i32_0 = arith.constant 0 : i32
    return %c0_i32 : i32
  }
  func.func @transform_1(%arg0: i32, %arg1: i32) -> (i32, i32, i32) {
    %c0_i32 = arith.constant 0 : i32
    %c0_i32_0 = arith.constant 0 : i32
    %c0_i32_1 = arith.constant 0 : i32
    return %arg0, %c0_i32, %c0_i32_0 : i32, i32, i32
  }
  func.func @transform_2(%arg0: i32, %arg1: i32) -> (i32, i32, i32) {
    %c0_i32 = arith.constant 0 : i32
    %c0_i32_0 = arith.constant 0 : i32
    %c0_i32_1 = arith.constant 0 : i32
    return %arg0, %c0_i32, %c0_i32_0 : i32, i32, i32
  }
  func.func @transform_3(%arg0: i32, %arg1: i32) -> (i32, i32, i32) {
    %c0_i32 = arith.constant 0 : i32
    %c0_i32_0 = arith.constant 0 : i32
    return %arg0, %c0_i32, %arg1 : i32, i32, i32
  }
  func.func @transform_4(%arg0: i32, %arg1: i32) -> (i32, i32, i32) {
    %c0_i32 = arith.constant 0 : i32
    %c0_i32_0 = arith.constant 0 : i32
    return %arg0, %c0_i32, %arg1 : i32, i32, i32
  }
}

</mosaic_0001>

<llo_original>
// kernel: tpu_custom_call.1
$region0: #{tpu_custom_call.1}
  #allocation0 [shape = 'u32[]', space=smem, size = 0x4, offset = 0x4, fixed_abs, tag = 'smem constant byte address 0x4 - core index']
  #allocation1 [shape = 'u32[144,128]{1,0:T(1,128)}', space=vmem, size = 0x12000, scoped, tag = 'internal scratch']
  %s0 = inlined_call_operand.hbm [shape: f32[2], index: 0, kind: input, shape index: {}]
  %s1 = inlined_call_operand.hbm [shape: f32[2,8,8], index: 1, kind: input, shape index: {}]
  %s2 = inlined_call_operand.vmem [shape: f32[2,1,8], index: 2, kind: input, shape index: {}]
  %s3 = inlined_call_operand.hbm [shape: f32[2,8,256], index: 3, kind: input, shape index: {}]
  %s4 = inlined_call_operand.hbm [shape: f32[2,8,256], index: 4, kind: output, shape index: {}]
  %s5 = sld [smem:[#allocation0]]
  $region38: #{tpu_custom_call.1} parent=0
    _
  %s7 = ssub.s32 1, %s5
  %s8 = scalar_select 0, %s7, %s5
  $region1: #{tpu_custom_call.1} parent=0
    #allocation2 [shape = 'u8[512]{0}', space=smem, size = 0x200, scoped, tag = 'input window, operand 0, single buffered']
    #allocation3 [shape = 's32[1]{0}', space=sflag, size = 0x4, scoped, tag = 'scoped memory for tpu_custom_call.1']
    #allocation4 [shape = 's32[1]{0}', space=sflag, size = 0x4, scoped, tag = 'scoped memory for tpu_custom_call.1']
    #allocation5 [shape = 's32[1]{0}', space=sflag, size = 0x4, scoped, tag = 'scoped memory for tpu_custom_call.1']
    #allocation6 [shape = 'u8[8192]{0}', space=vmem, size = 0x2000, scoped, tag = 'input window, operand 1, single buffered']
    #allocation7 [shape = 'u8[16384]{0}', space=vmem, size = 0x4000, scoped, tag = 'input window, operand 3, single buffered']
    #allocation8 [shape = 's32[1]{0}', space=sflag, size = 0x4, scoped, tag = 'scoped memory for tpu_custom_call.1']
    #allocation9 [shape = 'u8[16384]{0}', space=vmem, size = 0x4000, scoped, tag = 'output window, operand 0, single buffered']
    %9 = vsyncpa [#allocation5], 0
    %10 = vsyncpa [#allocation3], 0
    %11 = vsyncpa [#allocation8], 0
    %12 = vsyncpa [#allocation4], 0
    // Predicated region
    $region2: #{tpu_custom_call.1} parent=1 // pred_check
      _
    $region3: #{tpu_custom_call.1} parent=1 // pred_check_branch
      %14 = sbr.rel (0) target = $region5
    $region4: #{tpu_custom_call.1} parent=1 // pred_region
      %s16 = ssub.s32 16, 16
      %17 = vsyncadd [#allocation5], %s16
      %20 = dma.hbm_to_smem %s0, 16, [#allocation2], [#allocation5]
    $region5: #{tpu_custom_call.1} parent=1 // pred_fallthru
      _
    // Predicated region
    $region6: #{tpu_custom_call.1} parent=1 // pred_check
      _
    $region7: #{tpu_custom_call.1} parent=1 // pred_check_branch
      %22 = sbr.rel (0) target = $region9
    $region8: #{tpu_custom_call.1} parent=1 // pred_region
      %s24 = ssub.s32 256, 256
      %25 = vsyncadd [#allocation3], %s24
      %s26 = sshll.u32 [#allocation6], 4
      %s27 = int_to_ptr.vmem [resolvable:$true] %s26
      %32 = dma.hbm_to_vmem [thread:$0]  %s1, 256, %s27, [#allocation3], 128, 128, 8
    $region9: #{tpu_custom_call.1} parent=1 // pred_fallthru
      _
    // Predicated region
    $region10: #{tpu_custom_call.1} parent=1 // pred_check
      _
    $region11: #{tpu_custom_call.1} parent=1 // pred_check_branch
      %34 = sbr.rel (0) target = $region13
    $region12: #{tpu_custom_call.1} parent=1 // pred_region
      _
    $region13: #{tpu_custom_call.1} parent=1 // pred_fallthru
      _
    // Predicated region
    $region14: #{tpu_custom_call.1} parent=1 // pred_check
      _
    $region15: #{tpu_custom_call.1} parent=1 // pred_check_branch
      %36 = sbr.rel (0) target = $region17
    $region16: #{tpu_custom_call.1} parent=1 // pred_region
      %s38 = ssub.s32 512, 512
      %39 = vsyncadd [#allocation8], %s38
      %s40 = sshll.u32 [#allocation7], 4
      %s41 = int_to_ptr.vmem [resolvable:$true] %s40
      %46 = dma.hbm_to_vmem [thread:$0]  %s3, 512, %s41, [#allocation8], 256, 256, 16
    $region17: #{tpu_custom_call.1} parent=1 // pred_fallthru
      _
    // Predicated region
    $region18: #{tpu_custom_call.1} parent=1 // pred_check
      _
    $region19: #{tpu_custom_call.1} parent=1 // pred_check_branch
      %48 = sbr.rel (0) target = $region21
    $region20: #{tpu_custom_call.1} parent=1 // pred_region
      %49 = dma.done [#allocation5], 16
    $region21: #{tpu_custom_call.1} parent=1 // pred_fallthru
      _
    // Predicated region
    $region22: #{tpu_custom_call.1} parent=1 // pred_check
      _
    $region23: #{tpu_custom_call.1} parent=1 // pred_check_branch
      %51 = sbr.rel (0) target = $region25
    $region24: #{tpu_custom_call.1} parent=1 // pred_region
      %52 = dma.done [#allocation3], 256
    $region25: #{tpu_custom_call.1} parent=1 // pred_fallthru
      _
    // Predicated region
    $region26: #{tpu_custom_call.1} parent=1 // pred_check
      _
    $region27: #{tpu_custom_call.1} parent=1 // pred_check_branch
      %54 = sbr.rel (0) target = $region29
    $region28: #{tpu_custom_call.1} parent=1 // pred_region
      %55 = dma.done [#allocation8], 512
    $region29: #{tpu_custom_call.1} parent=1 // pred_fallthru
      _
    %56 = sfence
    %s57 = smul.u32 0, 2
    %v58 = vld [vmem:[%s2] sm:$0x1]
    %s59 = sld [smem:[#allocation2 + %s57]]
    %v60 = vstv %s59
    %v61 = vxor.u32 %v60, 2147483648
    %v62 = vmul.f32 %v61, 1.442695
    %v63 = vpow.pop %v62
    %v64 = vadd.f32 %v63, 1.0
    %v65 = vrcp.pop %v64
    %v66 = vmul.f32 1.0, %v65
    %v67 = vmul.f32 %v66, %v58
    %v68 = vmax.f32 %v58, 1e-06
    %70 = vset.pattern.permute.xlu0 0
    %71 = vperm.xlu0 %70, %v67
    %v72 = vpop.permute.xlu0 %71
    %v74 = vlaneseq
    %v75 = vshrl.u32 %v74, 7
    %v76 = vsub.s32 0, %v75
    %v77 = vrot.slane %v72, %v76
    %v78 = vsub.f32 %v68, %v77
    %v79 = vmax.f32 %v78, 0.0
    %v80 = vxor.u32 %v78, 2147483648
    %v81 = vmul.f32 %v80, 1.442695
    %v82 = vpow.pop %v81
    %v83 = vadd.f32 %v82, 1.0
    %v84 = vrcp.pop %v83
    %v85 = vmul.f32 1.0, %v84
    %v86 = vmul.f32 %v77, %v85
    %v87 = vadd.f32 %v79, %v86
    %v88 = vld [vmem:[#allocation6] sm:$0xff]
    %v90 = vlaneseq
    %v91 = vshrl.u32 %v90, 7
    %v92 = vsub.s32 0, %v91
    %v93 = vrot.slane %v87, %v92
    %v95 = vmul.f32 %v88, %v93
    %v96 = vld [vmem:[#allocation7] sm:$0xff]
    %v97 = vld [vmem:[#allocation7 + $0x8] sm:$0xff]
    %vm98 = vcmask 64512
    %v100 = vsel %vm98, %v95, 0
    %102 = vmatprep.subr.mxu0 %v97
    %103 = vmatpush1.msra.mxu0 %v96
    %104 = vmatprep.subr.mxu0 0.0
    %105 = vmatpush1.msra.mxu0 0.0
    %106 = vmatprep.subr.mxu0 0.0
    %107 = vmatpush1.msra.mxu0 0.0
    %108 = vmatprep.subr.mxu0 0.0
    %109 = vmatpush1.msra.mxu0 0.0
    %110 = vmatprep.subr.mxu0 0.0
    %111 = vmatpush1.msra.mxu0 0.0
    %112 = vmatprep.subr.mxu0 0.0
    %113 = vmatpush1.msra.mxu0 0.0
    %114 = vmatprep.subr.mxu0 0.0
    %115 = vmatpush1.msra.mxu0 0.0
    %116 = vmatprep.subr.mxu0 0.0
    %117 = vmatpush1.msra.mxu0 0.0
    %118 = vmatprep.subr.mxu0 0.0
    %119 = vmatpush1.msra.mxu0 0.0
    %120 = vmatprep.subr.mxu0 0.0
    %121 = vmatpush1.msra.mxu0 0.0
    %122 = vmatprep.subr.mxu0 0.0
    %123 = vmatpush1.msra.mxu0 0.0
    %124 = vmatprep.subr.mxu0 0.0
    %125 = vmatpush1.msra.mxu0 0.0
    %126 = vmatprep.subr.mxu0 0.0
    %127 = vmatpush1.msra.mxu0 0.0
    %128 = vmatprep.subr.mxu0 0.0
    %129 = vmatpush1.msra.mxu0 0.0
    %130 = vmatprep.subr.mxu0 0.0
    %131 = vmatpush1.msra.mxu0 0.0
    %132 = vmatprep.subr.mxu0 0.0
    %133 = vmatpush1.msra.mxu0 0.0
    %134 = vmatprep.subr.mxu0 0.0
    %135 = vmatpush1.msra.mxu0 0.0
    %136 = vmatprep.subr.mxu0 0.0
    %137 = vmatpush1.msra.mxu0 0.0
    %138 = vmatprep.subr.mxu0 0.0
    %139 = vmatpush1.msra.mxu0 0.0
    %140 = vmatprep.subr.mxu0 0.0
    %141 = vmatpush1.msra.mxu0 0.0
    %142 = vmatprep.subr.mxu0 0.0
    %143 = vmatpush1.msra.mxu0 0.0
    %144 = vmatprep.subr.mxu0 0.0
    %145 = vmatpush1.msra.mxu0 0.0
    %146 = vmatprep.subr.mxu0 0.0
    %147 = vmatpush1.msra.mxu0 0.0
    %148 = vmatprep.subr.mxu0 0.0
    %149 = vmatpush1.msra.mxu0 0.0
    %150 = vmatprep.subr.mxu0 0.0
    %151 = vmatpush1.msra.mxu0 0.0
    %152 = vmatprep.subr.mxu0 0.0
    %153 = vmatpush1.msra.mxu0 0.0
    %154 = vmatprep.subr.mxu0 0.0
    %155 = vmatpush1.msra.mxu0 0.0
    %156 = vmatprep.subr.mxu0 0.0
    %157 = vmatpush1.msra.mxu0 0.0
    %158 = vmatprep.subr.mxu0 0.0
    %159 = vmatpush1.msra.mxu0 0.0
    %160 = vmatprep.subr.mxu0 0.0
    %161 = vmatpush1.msra.mxu0 0.0
    %162 = vmatprep.subr.mxu0 0.0
    %163 = vmatpush1.msra.mxu0 0.0
    %164 = vmatprep.subr.mxu0 0.0
    %165 = vmatpush1.msra.mxu0 0.0
    %166 = vmatprep.mubr.f32.mxu0 0.0
    %167 = vmatmul.mubr.f32.gmra.mrb[0].mxu0 %v100
    %v168 = vpop.f32.mrb[0].mxu0
    %v169 = vadd.f32 0.0, %v168
    %v170 = vpop.f32.mrb[0].mxu0
    %v171 = vadd.f32 0.0, %v170
    %172 = vdwg.mxu0
    %173 = vst [vmem:[#allocation9] sm:$0xff] %v169
    %174 = vst [vmem:[#allocation9 + $0x8] sm:$0xff] %v171
    %s175 = scalar_lea.vmem %s2, 1
    %v176 = vld [vmem:[%s175] sm:$0x1]
    %s177 = sadd.s32 %s57, 1
    %s178 = sld [smem:[#allocation2 + %s177]]
    %v179 = vstv %s178
    %v180 = vxor.u32 %v179, 2147483648
    %v181 = vmul.f32 %v180, 1.442695
    %v182 = vpow.pop %v181
    %v183 = vadd.f32 %v182, 1.0
    %v184 = vrcp.pop %v183
    %v185 = vmul.f32 1.0, %v184
    %v186 = vmul.f32 %v185, %v176
    %v187 = vmax.f32 %v176, 1e-06
    %189 = vset.pattern.permute.xlu0 0
    %190 = vperm.xlu0 %189, %v186
    %v191 = vpop.permute.xlu0 %190
    %v193 = vlaneseq
    %v194 = vshrl.u32 %v193, 7
    %v195 = vsub.s32 0, %v194
    %v196 = vrot.slane %v191, %v195
    %v197 = vsub.f32 %v187, %v196
    %v198 = vmax.f32 %v197, 0.0
    %v199 = vxor.u32 %v197, 2147483648
    %v200 = vmul.f32 %v199, 1.442695
    %v201 = vpow.pop %v200
    %v202 = vadd.f32 %v201, 1.0
    %v203 = vrcp.pop %v202
    %v204 = vmul.f32 1.0, %v203
    %v205 = vmul.f32 %v196, %v204
    %v206 = vadd.f32 %v198, %v205
    %s207 = scalar_lea.vmem [#allocation6], 8
    %v208 = vld [vmem:[%s207] sm:$0xff]
    %v210 = vlaneseq
    %v211 = vshrl.u32 %v210, 7
    %v212 = vsub.s32 0, %v211
    %v213 = vrot.slane %v206, %v212
    %v215 = vmul.f32 %v208, %v213
    %s216 = scalar_lea.vmem [#allocation7], 16
    %v217 = vld [vmem:[%s216] sm:$0xff]
    %v218 = vld [vmem:[%s216 + $0x8] sm:$0xff]
    %v220 = vsel %vm98, %v215, 0
    %222 = vmatprep.subr.mxu0 %v218
    %223 = vmatpush1.msra.mxu0 %v217
    %224 = vmatprep.subr.mxu0 0.0
    %225 = vmatpush1.msra.mxu0 0.0
    %226 = vmatprep.subr.mxu0 0.0
    %227 = vmatpush1.msra.mxu0 0.0
    %228 = vmatprep.subr.mxu0 0.0
    %229 = vmatpush1.msra.mxu0 0.0
    %230 = vmatprep.subr.mxu0 0.0
    %231 = vmatpush1.msra.mxu0 0.0
    %232 = vmatprep.subr.mxu0 0.0
    %233 = vmatpush1.msra.mxu0 0.0
    %234 = vmatprep.subr.mxu0 0.0
    %235 = vmatpush1.msra.mxu0 0.0
    %236 = vmatprep.subr.mxu0 0.0
    %237 = vmatpush1.msra.mxu0 0.0
    %238 = vmatprep.subr.mxu0 0.0
    %239 = vmatpush1.msra.mxu0 0.0
    %240 = vmatprep.subr.mxu0 0.0
    %241 = vmatpush1.msra.mxu0 0.0
    %242 = vmatprep.subr.mxu0 0.0
    %243 = vmatpush1.msra.mxu0 0.0
    %244 = vmatprep.subr.mxu0 0.0
    %245 = vmatpush1.msra.mxu0 0.0
    %246 = vmatprep.subr.mxu0 0.0
    %247 = vmatpush1.msra.mxu0 0.0
    %248 = vmatprep.subr.mxu0 0.0
    %249 = vmatpush1.msra.mxu0 0.0
    %250 = vmatprep.subr.mxu0 0.0
    %251 = vmatpush1.msra.mxu0 0.0
    %252 = vmatprep.subr.mxu0 0.0
    %253 = vmatpush1.msra.mxu0 0.0
    %254 = vmatprep.subr.mxu0 0.0
    %255 = vmatpush1.msra.mxu0 0.0
    %256 = vmatprep.subr.mxu0 0.0
    %257 = vmatpush1.msra.mxu0 0.0
    %258 = vmatprep.subr.mxu0 0.0
    %259 = vmatpush1.msra.mxu0 0.0
    %260 = vmatprep.subr.mxu0 0.0
    %261 = vmatpush1.msra.mxu0 0.0
    %262 = vmatprep.subr.mxu0 0.0
    %263 = vmatpush1.msra.mxu0 0.0
    %264 = vmatprep.subr.mxu0 0.0
    %265 = vmatpush1.msra.mxu0 0.0
    %266 = vmatprep.subr.mxu0 0.0
    %267 = vmatpush1.msra.mxu0 0.0
    %268 = vmatprep.subr.mxu0 0.0
    %269 = vmatpush1.msra.mxu0 0.0
    %270 = vmatprep.subr.mxu0 0.0
    %271 = vmatpush1.msra.mxu0 0.0
    %272 = vmatprep.subr.mxu0 0.0
    %273 = vmatpush1.msra.mxu0 0.0
    %274 = vmatprep.subr.mxu0 0.0
    %275 = vmatpush1.msra.mxu0 0.0
    %276 = vmatprep.subr.mxu0 0.0
    %277 = vmatpush1.msra.mxu0 0.0
    %278 = vmatprep.subr.mxu0 0.0
    %279 = vmatpush1.msra.mxu0 0.0
    %280 = vmatprep.subr.mxu0 0.0
    %281 = vmatpush1.msra.mxu0 0.0
    %282 = vmatprep.subr.mxu0 0.0
    %283 = vmatpush1.msra.mxu0 0.0
    %284 = vmatprep.subr.mxu0 0.0
    %285 = vmatpush1.msra.mxu0 0.0
    %286 = vmatprep.mubr.f32.mxu0 0.0
    %287 = vmatmul.mubr.f32.gmra.mrb[0].mxu0 %v220
    %v288 = vpop.f32.mrb[0].mxu0
    %v289 = vadd.f32 0.0, %v288
    %v290 = vpop.f32.mrb[0].mxu0
    %v291 = vadd.f32 0.0, %v290
    %292 = vdwg.mxu0
    %s293 = scalar_lea.vmem [#allocation9], 16
    %294 = vst [vmem:[%s293] sm:$0xff] %v289
    %295 = vst [vmem:[%s293 + $0x8] sm:$0xff] %v291
    // Predicated region
    $region30: #{tpu_custom_call.1} parent=1 // pred_check
      _
    $region31: #{tpu_custom_call.1} parent=1 // pred_check_branch
      %297 = sbr.rel (0) target = $region33
    $region32: #{tpu_custom_call.1} parent=1 // pred_region
      %s299 = ssub.s32 512, 512
      %300 = vsyncadd [#allocation4], %s299
      %s301 = sshll.u32 [#allocation9], 4
      %s302 = int_to_ptr.vmem [resolvable:$true] %s301
      %307 = dma.vmem_to_hbm [thread:$0]  %s302, 512, %s4, [#allocation4], 256, 256, 16
    $region33: #{tpu_custom_call.1} parent=1 // pred_fallthru
      _
    // Predicated region
    $region34: #{tpu_custom_call.1} parent=1 // pred_check
      _
    $region35: #{tpu_custom_call.1} parent=1 // pred_check_branch
      %309 = sbr.rel (0) target = $region37
    $region36: #{tpu_custom_call.1} parent=1 // pred_region
      %310 = dma.done [#allocation4], 512
    $region37: #{tpu_custom_call.1} parent=1 // pred_fallthru
      _
    %311 = vsyncpa [#allocation3], 1
    %312 = vsyncpa [#allocation8], 1
    %313 = vsyncpa [#allocation4], 1
    %314 = vsyncpa [#allocation5], 1

</llo_original>
